<compile_context>
chip_gen: v6e
topology: v6e:2x2x1
jax: 0.10.0
libtpu: 0.0.40
codegen_flags: <defaults>
</compile_context>

<pallas_src>
import math

import jax
import jax.numpy as jnp
from jax.experimental import pallas as pl
from jax.experimental.pallas import tpu as pltpu

_LANE = 128      # vreg lane width
_SUBLANE = 8     # f32 sublane tile
_MAX_ROW_TILE = 4096   # rows of 128 lanes per block (~2 MiB f32) -> safe in VMEM


def _copy_kernel(x_ref, o_ref):
    # Flatten is pure data movement; the kernel is an identity copy of the
    # already-flattened (row-major) view.
    o_ref[...] = x_ref[...]


def flatten_pallas(x):
    """Pallas equivalent of `x.view(x.size(0), -1)` for a contiguous input."""
    B = x.shape[0]
    flat = math.prod(x.shape[1:])
    x2 = jnp.reshape(x, (B, flat))  # free row-major view == torch .view semantics

    if flat % (_LANE * _SUBLANE) == 0:
        # Lane-dense path: fold the flat axis into (rows, 128) so stores are
        # full-width, and tile rows so blocks stay small in VMEM.
        rows = flat // _LANE
        r_tile = rows
        if r_tile > _MAX_ROW_TILE:
            r_tile = _MAX_ROW_TILE
            while rows % r_tile != 0:       # rows is a multiple of 8, so this
                r_tile -= _SUBLANE          # terminates at a valid divisor.
        x3 = jnp.reshape(x2, (B, rows, _LANE))

        out = pl.pallas_call(
            _copy_kernel,
            out_shape=jax.ShapeDtypeStruct((B, rows, _LANE), x.dtype),
            grid_spec=pltpu.PrefetchScalarGridSpec(
                num_scalar_prefetch=0,
                grid=(B, rows // r_tile),
                in_specs=[pl.BlockSpec((1, r_tile, _LANE), lambda b, r: (b, r, 0))],
                out_specs=pl.BlockSpec((1, r_tile, _LANE), lambda b, r: (b, r, 0)),
            ),
            compiler_params=pltpu.CompilerParams(
                dimension_semantics=("parallel", "parallel")),
        )(x3)
        return jnp.reshape(out, (B, flat))

    # Fallback for flat sizes that are not a multiple of 8*128: a single block
    # equal to the full array shape (always tile-legal). Fine for small inputs.
    return pl.pallas_call(
        _copy_kernel,
        out_shape=jax.ShapeDtypeStruct((B, flat), x.dtype),
    )(x2)


flatten_pallas_jit = jax.jit(flatten_pallas)


if __name__ == "__main__":
    # Small shapes consistent with a 4-D feature-map input to Flatten.
    B, C, H, W = 2, 4, 16, 16

    key = jax.random.PRNGKey(0)
    x = jax.random.normal(key, (B, C, H, W), dtype=jnp.float32)

    out = flatten_pallas_jit(x)
    jax.block_until_ready(out)

    ref = jnp.reshape(x, (B, -1))
    assert out.shape == (B, C * H * W), out.shape
    assert jnp.array_equal(out, ref), "mismatch vs reference flatten"

    print("KERNEL_OK")
</pallas_src>

<mosaic_0001>
module attributes {stable_mosaic.version = 11 : i64} {
  func.func @_copy_kernel(%arg0: i32, %arg1: i32, %arg2: memref<1x8x128xf32, #tpu.memory_space<vmem>>, %arg3: memref<1x8x128xf32, #tpu.memory_space<vmem>>) attributes {dimension_semantics = [#tpu.dimension_semantics<parallel>, #tpu.dimension_semantics<parallel>], iteration_bounds = array<i64: 2, 1>, scalar_prefetch = 0 : i64, scratch_operands = 0 : i64, tpu.core_type = #tpu.core_type<tc>, window_params = [{transform_indices = @transform_0, window_bounds = array<i64: 1, 8, 128>}, {transform_indices = @transform_1, window_bounds = array<i64: 1, 8, 128>}]} {
    %c0 = arith.constant 0 : index
    %c0_0 = arith.constant 0 : index
    %c0_1 = arith.constant 0 : index
    %0 = vector.load %arg2[%c0, %c0_0, %c0_1] : memref<1x8x128xf32, #tpu.memory_space<vmem>>, vector<1x8x128xf32>
    %c0_2 = arith.constant 0 : index
    %c0_3 = arith.constant 0 : index
    %c0_4 = arith.constant 0 : index
    %1 = vector.load %arg3[%c0_2, %c0_3, %c0_4] : memref<1x8x128xf32, #tpu.memory_space<vmem>>, vector<1x8x128xf32>
    tpu.vector_store %arg3[%c0_2, %c0_3, %c0_4], %0 {strides = array<i32>} : memref<1x8x128xf32, #tpu.memory_space<vmem>>, vector<1x8x128xf32>,
    return
  }
  func.func @transform_0(%arg0: i32, %arg1: i32) -> (i32, i32, i32) {
    %c0_i32 = arith.constant 0 : i32
    %c0_i32_0 = arith.constant 0 : i32
    return %arg0, %arg1, %c0_i32 : i32, i32, i32
  }
  func.func @transform_1(%arg0: i32, %arg1: i32) -> (i32, i32, i32) {
    %c0_i32 = arith.constant 0 : i32
    %c0_i32_0 = arith.constant 0 : i32
    return %arg0, %arg1, %c0_i32 : i32, i32, i32
  }
}

</mosaic_0001>

<llo_original>
// kernel: flatten_pallas.1
$region0: #{flatten_pallas.1}
  #allocation0 [shape = 'u32[]', space=smem, size = 0x4, offset = 0x4, fixed_abs, tag = 'smem constant byte address 0x4 - core index']
  #allocation1 [shape = 'u32[144,128]{1,0:T(1,128)}', space=vmem, size = 0x12000, scoped, tag = 'internal scratch']
  %s0 = inlined_call_operand.vmem [shape: f32[2,8,128], index: 0, kind: input, shape index: {}]
  %s1 = inlined_call_operand.vmem [shape: f32[2,8,128], index: 1, kind: output, shape index: {}]
  %s2 = sld [smem:[#allocation0]]
  $region37: #{flatten_pallas.1} parent=0
    _
  %s4 = ssub.s32 1, %s2
  %s5 = scalar_select 0, %s4, %s2
  loop: start=0, step=1, limit=4
  $region2: #{flatten_pallas.1} parent=0 // loop_pre_header
    _
  $region3: #{flatten_pallas.1} parent=0 // loop_header
    %s7 = sphi 0, %s11
    %p8 = scmp.ge.s32.totalorder %s7, 4
    %s14 = sphi 0, %s26
    %s15 = sphi 0, %s22
    %s16 = sphi 0, %s14
    %s17 = sphi 0, %s15
    %s18 = sphi 0, %s16
    %s19 = sphi 0, %s17
    %s31 = sphi 0, %s33
    %s34 = sphi 0, %s31
    %s35 = sphi 0, %s34
    %s51 = sphi 0, %s35
    %s59 = sphi 0, %s61
    %s62 = sphi 0, %s59
    %s63 = sphi 0, %s62
    %s79 = sphi 0, %s63
  $region4: #{flatten_pallas.1} parent=0 // loop_header_branch
    %10 = sbr.rel (%p8) target = $region8
  $region5: #{flatten_pallas.1} parent=0 // loop_body
    %s12 = ssub.s32 %s7, 1
    %s13 = ssub.s32 %s7, 2
    %s20 = sadd.s32 1, %s15
    %p21 = scmp.ge.s32.totalorder %s20, 1
    %s22 = scalar_select %p21, 0, %s20
    %s23 = sadd.s32 1, %s14
    %s24 = scalar_select %p21, %s23, %s14
    %p25 = scmp.ge.s32.totalorder %s24, 2
    %s26 = scalar_select %p25, 0, %s24
    %s27 = ssub.s32 %s14, %s26
    %s28 = ssub.s32 %s15, %s22
    %s29 = sor.u32 %s27, %s28
    %p30 = scmp.eq.s32.totalorder %s29, 0
    %s32 = sadd.s32 %s31, 1
    %s33 = scalar_select %p30, %s31, %s32
    %p36 = pneg %p30
    %p37 = scmp.eq.s32.totalorder %s7, 1
    %p38 = por %p36, %p37
    %p39 = scmp.ne.s32.totalorder %s31, %s34
    %p40 = scmp.eq.s32.totalorder %s7, 0
    %p41 = por %p39, %p40
    %p42 = scmp.ne.s32.totalorder %s31, %s34
    %p43 = scmp.eq.s32.totalorder %s12, 1
    %p44 = por %p42, %p43
    %p45 = scmp.ne.s32.totalorder %s34, %s35
    %p46 = scmp.eq.s32.totalorder %s12, 0
    %p47 = por %p45, %p46
    %p48 = scmp.ne.s32.totalorder %s34, %s35
    %p49 = scmp.eq.s32.totalorder %s13, 1
    %p50 = por %p48, %p49
    %p52 = scmp.ne.s32.totalorder %s35, %s51
    %p53 = scmp.eq.s32.totalorder %s13, 0
    %p54 = por %p52, %p53
    %s55 = ssub.s32 %s14, %s26
    %s56 = ssub.s32 %s15, %s22
    %s57 = sor.u32 %s55, %s56
    %p58 = scmp.eq.s32.totalorder %s57, 0
    %s60 = sadd.s32 %s59, 1
    %s61 = scalar_select %p58, %s59, %s60
    %p64 = pneg %p58
    %p65 = scmp.eq.s32.totalorder %s7, 1
    %p66 = por %p64, %p65
    %p67 = scmp.ne.s32.totalorder %s59, %s62
    %p68 = scmp.eq.s32.totalorder %s7, 0
    %p69 = por %p67, %p68
    %p70 = scmp.ne.s32.totalorder %s59, %s62
    %p71 = scmp.eq.s32.totalorder %s12, 1
    %p72 = por %p70, %p71
    %p73 = scmp.ne.s32.totalorder %s62, %s63
    %p74 = scmp.eq.s32.totalorder %s12, 0
    %p75 = por %p73, %p74
    %p76 = scmp.ne.s32.totalorder %s62, %s63
    %p77 = scmp.eq.s32.totalorder %s13, 1
    %p78 = por %p76, %p77
    %p80 = scmp.ne.s32.totalorder %s63, %s79
    %p81 = scmp.eq.s32.totalorder %s13, 0
    %p82 = por %p80, %p81
    %p83 = scmp.le.s32.totalorder 1, %s7
    %p84 = scmp.lt.s32.totalorder %s7, 3
    %p85 = pnand %p83, %p84
    %p86 = pneg %p85
    // Predicated region
    $region9: #{flatten_pallas.1} parent=5 // pred_check
      _
    $region10: #{flatten_pallas.1} parent=5 // pred_check_branch
      %88 = sbr.rel (%p85) target = $region12
    $region11: #{flatten_pallas.1} parent=5 // pred_region
      %s89 = ssub.s32 %s7, 1
    $region12: #{flatten_pallas.1} parent=5 // pred_fallthru
      _
    %p90 = scmp.lt.s32.totalorder %s7, 2
    // Predicated region
    $region13: #{flatten_pallas.1} parent=5 // pred_check
      %p91 = pneg %p90
    $region14: #{flatten_pallas.1} parent=5 // pred_check_branch
      %93 = sbr.rel (%p91) target = $region16
    $region15: #{flatten_pallas.1} parent=5 // pred_region
      // Predicated region
      $region17: #{flatten_pallas.1} parent=15 // pred_check
        %p94 = pneg %p41
      $region18: #{flatten_pallas.1} parent=15 // pred_check_branch
        %96 = sbr.rel (%p94) target = $region20
      $region19: #{flatten_pallas.1} parent=15 // pred_region
        %p97 = scmp.lt.s32.totalorder %s14, 1
        %s98 = scalar_select %p97, %s14, 1
        %p99 = scmp.lt.s32.totalorder %s15, 0
        %s100 = scalar_select %p99, %s15, 0
        %s101 = sadd.s32 %s100, %s98
        %s102 = smul.addr %s101, 8
        %s103 = scalar_lea.vmem %s0, %s102
      $region20: #{flatten_pallas.1} parent=15 // pred_fallthru
        _
    $region16: #{flatten_pallas.1} parent=5 // pred_fallthru
      _
    %p104 = scmp.le.s32.totalorder 1, %s7
    %p105 = scmp.lt.s32.totalorder %s7, 3
    %p106 = pnand %p104, %p105
    %p107 = pneg %p106
    // Predicated region
    $region21: #{flatten_pallas.1} parent=5 // pred_check
      _
    $region22: #{flatten_pallas.1} parent=5 // pred_check_branch
      %109 = sbr.rel (%p106) target = $region24
    $region23: #{flatten_pallas.1} parent=5 // pred_region
      %s110 = ssub.s32 %s7, 1
      %p111 = scmp.lt.s32.totalorder %s16, 1
      %s112 = scalar_select %p111, %s16, 1
      %p113 = scmp.lt.s32.totalorder %s17, 0
      %s114 = scalar_select %p113, %s17, 0
      %s115 = sadd.s32 %s114, %s112
      %s116 = smul.addr %s115, 8
      %s117 = scalar_lea.vmem %s0, %s116
      %p118 = pneg %p47
      %p119 = pneg %p44
      %p120 = pneg %p75
      %p121 = pneg %p72
      %p122 = scmp.lt.s32.totalorder %s16, 1
      %s123 = scalar_select %p122, %s16, 1
      %p124 = scmp.lt.s32.totalorder %s17, 0
      %s125 = scalar_select %p124, %s17, 0
      %s126 = sadd.s32 %s125, %s123
      %s127 = smul.addr %s126, 8
      %s128 = scalar_lea.vmem %s1, %s127
      %p129 = scmp.lt.s32.totalorder %s16, 1
      %s130 = scalar_select %p129, %s16, 1
      %p131 = scmp.lt.s32.totalorder %s17, 0
      %s132 = scalar_select %p131, %s17, 0
      %s133 = sadd.s32 %s132, %s130
      %s134 = smul.addr %s133, 8
      %s135 = scalar_lea.vmem %s0, %s134
      %p136 = scmp.lt.s32.totalorder %s16, 1
      %s137 = scalar_select %p136, %s16, 1
      %p138 = scmp.lt.s32.totalorder %s17, 0
      %s139 = scalar_select %p138, %s17, 0
      %s140 = sadd.s32 %s139, %s137
      %s141 = smul.addr %s140, 8
      %s142 = scalar_lea.vmem %s1, %s141
      %v143 = vld [vmem:[%s135] sm:$0xff]
      %144 = vst [vmem:[%s142] sm:$0xff] %v143
      %p145 = scmp.lt.s32.totalorder %s16, 1
      %s146 = scalar_select %p145, %s16, 1
      %p147 = scmp.lt.s32.totalorder %s17, 0
      %s148 = scalar_select %p147, %s17, 0
      %s149 = sadd.s32 %s148, %s146
      %s150 = smul.addr %s149, 8
      %s151 = scalar_lea.vmem %s1, %s150
      // Predicated region
      $region25: #{flatten_pallas.1} parent=23 // pred_check
        %p152 = pneg %p72
      $region26: #{flatten_pallas.1} parent=23 // pred_check_branch
        %154 = sbr.rel (%p152) target = $region28
      $region27: #{flatten_pallas.1} parent=23 // pred_region
        _
      $region28: #{flatten_pallas.1} parent=23 // pred_fallthru
        _
    $region24: #{flatten_pallas.1} parent=5 // pred_fallthru
      _
    %p155 = scmp.le.s32.totalorder 2, %s7
    // Predicated region
    $region29: #{flatten_pallas.1} parent=5 // pred_check
      %p156 = pneg %p155
    $region30: #{flatten_pallas.1} parent=5 // pred_check_branch
      %158 = sbr.rel (%p156) target = $region32
    $region31: #{flatten_pallas.1} parent=5 // pred_region
      %s159 = ssub.s32 %s7, 2
      // Predicated region
      $region33: #{flatten_pallas.1} parent=31 // pred_check
        %p160 = pneg %p78
      $region34: #{flatten_pallas.1} parent=31 // pred_check_branch
        %162 = sbr.rel (%p160) target = $region36
      $region35: #{flatten_pallas.1} parent=31 // pred_region
        %p163 = scmp.lt.s32.totalorder %s18, 1
        %s164 = scalar_select %p163, %s18, 1
        %p165 = scmp.lt.s32.totalorder %s19, 0
        %s166 = scalar_select %p165, %s19, 0
        %s167 = sadd.s32 %s166, %s164
        %s168 = smul.addr %s167, 8
        %s169 = scalar_lea.vmem %s1, %s168
      $region36: #{flatten_pallas.1} parent=31 // pred_fallthru
        _
    $region32: #{flatten_pallas.1} parent=5 // pred_fallthru
      _
  $region6: #{flatten_pallas.1} parent=0 // loop_footer
    %s11 = sadd.s32 1, %s7
  $region7: #{flatten_pallas.1} parent=0 // loop_footer_branch
    %6 = sbr.rel target = $region3
  $region8: #{flatten_pallas.1} parent=0 // loop_exit
    _

</llo_original>
